<compile_context>
chip_gen: v6e
topology: v6e:2x2x1
jax: 0.10.0
libtpu: 0.0.40
codegen_flags: <defaults>
</compile_context>

<pallas_src>
import math

import jax
import jax.numpy as jnp
from jax.experimental import pallas as pl
from jax.experimental.pallas import tpu as pltpu


_TILE_BYTES = 2 * 1024 * 1024          # ~2 MiB per tile (in+out double-buffered
                                       # => ~8 MiB, safe on v5e/v6e/v7x defaults)
_SINGLE_BLOCK_BYTES = 4 * 1024 * 1024  # ragged (non-128-aligned) tensors up to
                                       # this size are copied as one VMEM block


def _copy_kernel(x_ref, o_ref):
    # Identity copy of the current tile (the only "compute" of a view).
    o_ref[...] = x_ref[...]


def _resolve_size(numel, size):
    size = list(size)
    neg = [i for i, s in enumerate(size) if s == -1]
    if len(neg) > 1:
        raise ValueError("only one dimension can be -1")
    if neg:
        known = 1
        for i, s in enumerate(size):
            if i != neg[0]:
                known *= s
        size[neg[0]] = numel // known
    if math.prod(size) != numel:
        raise ValueError(f"cannot view {numel} elements as {tuple(size)}")
    return tuple(size)


def _sublane_packing(dtype):
    # Native sublane packing: 8 rows/vreg for 32-bit, 16 for 16-bit, 32 for 8-bit.
    itemsize = jnp.dtype(dtype).itemsize
    return 8 * max(1, 4 // max(itemsize, 1))


def _pick_lanes(numel):
    # Widest lane-dense last dim dividing the element count -> longer DMA
    # bursts, fewer (and unmasked) vector stores.
    for lanes in (2048, 1024, 512, 256, 128):
        if numel % lanes == 0:
            return lanes
    return 0  # not 128-aligned -> ragged path


def _tiled_copy(flat, lanes):
    """Streaming identity copy of a lane-aligned flat buffer via Pallas."""
    numel = flat.shape[0]
    dtype = flat.dtype
    itemsize = jnp.dtype(dtype).itemsize
    rows = numel // lanes

    packing = _sublane_packing(dtype)
    tile_rows = max(packing,
                    (_TILE_BYTES // (lanes * itemsize)) // packing * packing)
    # Never allocate a tile taller than the array itself; `rows` as the full
    # extent is always a legal block dim, partial last blocks are masked.
    tile_rows = min(tile_rows, rows)

    grid = (pl.cdiv(rows, tile_rows),)

    slab = jnp.reshape(flat, (rows, lanes))  # metadata-only reshape
    out_slab = pl.pallas_call(
        _copy_kernel,
        out_shape=jax.ShapeDtypeStruct((rows, lanes), dtype),
        grid_spec=pltpu.PrefetchScalarGridSpec(
            num_scalar_prefetch=0,
            grid=grid,
            in_specs=[pl.BlockSpec((tile_rows, lanes), lambda i: (i, 0))],
            out_specs=pl.BlockSpec((tile_rows, lanes), lambda i: (i, 0)),
        ),
        compiler_params=pltpu.CompilerParams(
            dimension_semantics=("parallel",),  # megacore-sharded on v7x
        ),
        cost_estimate=pl.CostEstimate(
            flops=0, transcendentals=0, bytes_accessed=2 * numel * itemsize),
    )(slab)
    return jnp.reshape(out_slab, (-1,))


def _whole_block_copy(flat):
    """Single whole-array VMEM block copy for small non-128-aligned buffers."""
    numel = flat.shape[0]
    itemsize = jnp.dtype(flat.dtype).itemsize
    slab = jnp.reshape(flat, (1, numel))
    out = pl.pallas_call(
        _copy_kernel,
        out_shape=jax.ShapeDtypeStruct((1, numel), flat.dtype),
        cost_estimate=pl.CostEstimate(
            flops=0, transcendentals=0, bytes_accessed=2 * numel * itemsize),
    )(slab)
    return jnp.reshape(out, (-1,))


class View:
    """JAX/Pallas equivalent of the PyTorch `View` module."""

    def __init__(self, size):
        self.size = tuple(size)

    def __call__(self, tensor, *, use_pallas_copy=False):
        numel = tensor.size
        target = _resolve_size(numel, self.size)

        # Fast path (default): contiguous row-major view == metadata-only
        # reshape, zero HBM traffic.  Exactly torch.Tensor.view semantics.
        if not use_pallas_copy:
            return jnp.reshape(tensor, target)

        # Mandated-copy path: stream the flattened row-major element stream
        # through VMEM with a Pallas identity-copy kernel.
        flat = jnp.reshape(tensor, (-1,))  # metadata-only flatten
        lanes = _pick_lanes(numel)
        if lanes:
            out_flat = _tiled_copy(flat, lanes)
        elif numel * jnp.dtype(tensor.dtype).itemsize <= _SINGLE_BLOCK_BYTES:
            out_flat = _whole_block_copy(flat)
        else:
            # TODO(synk): large non-128-aligned buffers fall back to the
            # metadata reshape instead of a padded-copy HBM round trip.
            out_flat = flat
        return jnp.reshape(out_flat, target)  # metadata-only reshape


if __name__ == "__main__":
    key = jax.random.PRNGKey(0)
    k1, k2, k3 = jax.random.split(key, 3)

    # Small NCHW-style input, consistent with the decoder's reshape usage.
    x = jax.random.normal(k1, (2, 4, 16, 16), dtype=jnp.float32)
    view = View((2, -1))  # -> (2, 1024)
    ref = jnp.reshape(x, (2, 1024))

    # 1) Default fast path (metadata-only view).
    y_fast = jax.block_until_ready(view(x))
    assert y_fast.shape == (2, 1024) and y_fast.dtype == x.dtype
    assert bool(jnp.all(y_fast == ref))

    # 2) Pallas streaming-copy path (tiled, lane-dense, f32).
    y_copy = jax.block_until_ready(view(x, use_pallas_copy=True))
    assert y_copy.shape == (2, 1024) and y_copy.dtype == x.dtype
    assert bool(jnp.all(y_copy == ref))

    # 3) Pallas copy path with a 16-bit dtype (sublane packing = 16).
    xb = jax.random.normal(k2, (2, 8, 16, 16), dtype=jnp.float32).astype(jnp.bfloat16)
    yb = jax.block_until_ready(View((2, -1))(xb, use_pallas_copy=True))
    assert yb.shape == (2, 2048) and yb.dtype == jnp.bfloat16
    assert bool(jnp.all(yb == jnp.reshape(xb, (2, 2048))))

    # 4) Ragged (non-128-aligned) small tensor -> single whole-block copy.
    xr = jax.random.normal(k3, (3, 5, 7), dtype=jnp.float32)
    yr = jax.block_until_ready(View((21, -1))(xr, use_pallas_copy=True))
    assert yr.shape == (21, 5)
    assert bool(jnp.all(yr == jnp.reshape(xr, (21, 5))))

    print("KERNEL_OK")
</pallas_src>

<mosaic_0001>
module attributes {stable_mosaic.version = 11 : i64} {
  func.func @_copy_kernel(%arg0: i32, %arg1: memref<1x2048xf32, #tpu.memory_space<vmem>>, %arg2: memref<1x2048xf32, #tpu.memory_space<vmem>>) attributes {dimension_semantics = [#tpu.dimension_semantics<parallel>], iteration_bounds = array<i64: 1>, scalar_prefetch = 0 : i64, scratch_operands = 0 : i64, tpu.core_type = #tpu.core_type<tc>, window_params = [{transform_indices = @transform_0, window_bounds = array<i64: 1, 2048>}, {transform_indices = @transform_1, window_bounds = array<i64: 1, 2048>}]} {
    %c0 = arith.constant 0 : index
    %c0_0 = arith.constant 0 : index
    %0 = vector.load %arg1[%c0, %c0_0] : memref<1x2048xf32, #tpu.memory_space<vmem>>, vector<1x2048xf32>
    %c0_1 = arith.constant 0 : index
    %c0_2 = arith.constant 0 : index
    %1 = vector.load %arg2[%c0_1, %c0_2] : memref<1x2048xf32, #tpu.memory_space<vmem>>, vector<1x2048xf32>
    tpu.vector_store %arg2[%c0_1, %c0_2], %0 {strides = array<i32>} : memref<1x2048xf32, #tpu.memory_space<vmem>>, vector<1x2048xf32>,
    return
  }
  func.func @transform_0(%arg0: i32) -> (i32, i32) {
    %c0_i32 = arith.constant 0 : i32
    %c0_i32_0 = arith.constant 0 : i32
    return %arg0, %c0_i32 : i32, i32
  }
  func.func @transform_1(%arg0: i32) -> (i32, i32) {
    %c0_i32 = arith.constant 0 : i32
    %c0_i32_0 = arith.constant 0 : i32
    return %arg0, %c0_i32 : i32, i32
  }
}

</mosaic_0001>

<llo_original>
// kernel: tpu_custom_call.1
$region0: #{tpu_custom_call.1}
  #allocation0 [shape = 'u32[]', space=smem, size = 0x4, offset = 0x4, fixed_abs, tag = 'smem constant byte address 0x4 - core index']
  #allocation1 [shape = 'u32[144,128]{1,0:T(1,128)}', space=vmem, size = 0x12000, scoped, tag = 'internal scratch']
  %s0 = inlined_call_operand.hbm [shape: f32[1,2048], index: 0, kind: input, shape index: {}]
  %s1 = inlined_call_operand.hbm [shape: f32[1,2048], index: 1, kind: output, shape index: {}]
  %s2 = sld [smem:[#allocation0]]
  $region18: #{tpu_custom_call.1} parent=0
    _
  %s4 = ssub.s32 1, %s2
  %s5 = scalar_select 0, %s4, %s2
  $region1: #{tpu_custom_call.1} parent=0
    #allocation2 [shape = 'u8[8192]{0}', space=vmem, size = 0x2000, scoped, tag = 'input window, operand 0, single buffered']
    #allocation3 [shape = 's32[1]{0}', space=sflag, size = 0x4, scoped, tag = 'scoped memory for tpu_custom_call.1']
    #allocation4 [shape = 's32[1]{0}', space=sflag, size = 0x4, scoped, tag = 'scoped memory for tpu_custom_call.1']
    #allocation5 [shape = 'u8[8192]{0}', space=vmem, size = 0x2000, scoped, tag = 'output window, operand 0, single buffered']
    %6 = vsyncpa [#allocation3], 0
    %7 = vsyncpa [#allocation4], 0
    // Predicated region
    $region2: #{tpu_custom_call.1} parent=1 // pred_check
      _
    $region3: #{tpu_custom_call.1} parent=1 // pred_check_branch
      %9 = sbr.rel (0) target = $region5
    $region4: #{tpu_custom_call.1} parent=1 // pred_region
      %s11 = ssub.s32 256, 256
      %12 = vsyncadd [#allocation3], %s11
      %s14 = sshll.u32 [#allocation2], 4
      %s15 = int_to_ptr.vmem [resolvable:$true] %s14
      %17 = dma.hbm_to_vmem [thread:$0]  %s0, 256, %s15, [#allocation3]
    $region5: #{tpu_custom_call.1} parent=1 // pred_fallthru
      _
    // Predicated region
    $region6: #{tpu_custom_call.1} parent=1 // pred_check
      _
    $region7: #{tpu_custom_call.1} parent=1 // pred_check_branch
      %19 = sbr.rel (0) target = $region9
    $region8: #{tpu_custom_call.1} parent=1 // pred_region
      %20 = dma.done [#allocation3], 256
    $region9: #{tpu_custom_call.1} parent=1 // pred_fallthru
      _
    %v21 = vld [vmem:[#allocation2] sm:$0xff]
    %v22 = vld [vmem:[#allocation2 + $0x8] sm:$0xff]
    %23 = vst [vmem:[#allocation5] sm:$0xff] %v21
    %24 = vst [vmem:[#allocation5 + $0x8] sm:$0xff] %v22
    // Predicated region
    $region10: #{tpu_custom_call.1} parent=1 // pred_check
      _
    $region11: #{tpu_custom_call.1} parent=1 // pred_check_branch
      %26 = sbr.rel (0) target = $region13
    $region12: #{tpu_custom_call.1} parent=1 // pred_region
      %s28 = ssub.s32 256, 256
      %29 = vsyncadd [#allocation4], %s28
      %s31 = sshll.u32 [#allocation5], 4
      %s32 = int_to_ptr.vmem [resolvable:$true] %s31
      %34 = dma.vmem_to_hbm [thread:$0]  %s32, 256, %s1, [#allocation4]
    $region13: #{tpu_custom_call.1} parent=1 // pred_fallthru
      _
    // Predicated region
    $region14: #{tpu_custom_call.1} parent=1 // pred_check
      _
    $region15: #{tpu_custom_call.1} parent=1 // pred_check_branch
      %36 = sbr.rel (0) target = $region17
    $region16: #{tpu_custom_call.1} parent=1 // pred_region
      %37 = dma.done [#allocation4], 256
    $region17: #{tpu_custom_call.1} parent=1 // pred_fallthru
      _
    %38 = vsyncpa [#allocation3], 1
    %39 = vsyncpa [#allocation4], 1

</llo_original>
